<compile_context>
chip_gen: v7x
topology: tpu7x:2x2x1
jax: 0.10.0
libtpu: 0.0.40
codegen_flags: <defaults>
</compile_context>

<pallas_src>
import functools

import jax
import jax.numpy as jnp
from jax import lax
from jax.experimental import pallas as pl
from jax.experimental.pallas import tpu as pltpu

EPS = 1e-5          # torch.nn.BatchNorm1d default eps
_NCORES = 2         # leading "parallel" grid axis (v7x megacore); harmless elsewhere


def _cdiv(a, b):
    return -(-a // b)


def _round_up(x, m):
    return _cdiv(x, m) * m


def _cost(flops, bytes_accessed, transcendentals=0):
    return pl.CostEstimate(flops=int(flops), transcendentals=int(transcendentals),
                           bytes_accessed=int(bytes_accessed))


def _vmem_budget_bytes():
    """Generation-aware scoped-VMEM budget: ~75% of physical, capped at 100 MiB.

    v5e/v6e (128 MiB physical) -> 96 MiB; v7x (64 MiB per-TC) -> 48 MiB.
    """
    try:
        phys = int(pltpu.get_tpu_info().vmem_capacity_bytes)
    except Exception:
        phys = 64 * 1024 * 1024          # conservative floor (v7x per-TC VMEM)
    return min(100 * 1024 * 1024, (phys * 3) // 4)


def _bn_relu(z, stats, gb, inv_batch):
    """Train-mode BatchNorm1d + ReLU from f32 [sum; sum_sq] stats (shape [2, H])."""
    mu = stats[0:1, :] * inv_batch
    var = jnp.maximum(stats[1:2, :] * inv_batch - mu * mu, 0.0)   # clamp cancellation
    zn = (z - mu) * lax.rsqrt(var + EPS) * gb[0:1, :] + gb[1:2, :]
    return jnp.maximum(zn, 0.0)                                   # Dropout(p=0) == id


# --------------------------------------------------------------------------- #
# Path 1: fully fused single-launch kernel (whole batch resident in VMEM).
# --------------------------------------------------------------------------- #
def _fused_encoder_kernel(x_ref, w1_ref, gb1_ref, w2_ref, gb2_ref, wo_ref, bo_ref,
                          out_ref, *, inv_batch, mxu_dtype):
    def hidden(h, w_ref, gb_ref):
        # Linear (bias dropped: cancelled by train-mode BN mean subtraction).
        z = jnp.dot(h.astype(mxu_dtype), w_ref[...],
                    preferred_element_type=jnp.float32)
        s = jnp.sum(z, axis=0, keepdims=True)
        sq = jnp.sum(z * z, axis=0, keepdims=True)
        sel = lax.broadcasted_iota(jnp.int32, (2, 1), 0)          # [[0],[1]]
        stats = jnp.where(sel == 0, s, sq)                        # (2, H), no concat
        return _bn_relu(z, stats, gb_ref[...], inv_batch)

    h = hidden(x_ref[...], w1_ref, gb1_ref)
    h = hidden(h, w2_ref, gb2_ref)
    out = jnp.dot(h.astype(mxu_dtype), wo_ref[...],
                  preferred_element_type=jnp.float32) + bo_ref[...]
    out_ref[...] = out.astype(out_ref.dtype)


# --------------------------------------------------------------------------- #
# Path 2: batch-tiled 3-pass pipeline for very large batches.
# BatchNorm needs *global* batch statistics, so each stats pass streams batch
# tiles and accumulates per-feature [sum; sum_sq] into a per-core-resident
# [1, 2, H] output block (pl.when init on inner step 0, inner axis "arbitrary",
# outer core axis "parallel").  z1/z2 are never written to HBM: they are
# recomputed from x (x is read 3x in bf16 instead).
# --------------------------------------------------------------------------- #
def _stats_accumulate(stats_ref, z, step_in_core, row0, *, batch, tile):
    @pl.when(step_in_core == 0)
    def _():
        stats_ref[...] = jnp.zeros_like(stats_ref)

    row = row0 + lax.broadcasted_iota(jnp.int32, (tile, 1), 0)
    zm = jnp.where(row < batch, z, 0.0)                           # drop padded rows
    s = jnp.sum(zm, axis=0, keepdims=True)                        # (1, H)
    sq = jnp.sum(zm * zm, axis=0, keepdims=True)                  # (1, H)
    sel = lax.broadcasted_iota(jnp.int32, (2, 1), 0)
    stats_ref[...] = stats_ref[...] + jnp.where(sel == 0, s, sq)[None, :, :]


def _pass1_kernel(x_ref, w1_ref, stats1_ref, *, batch, tile, nbpc, mxu_dtype):
    """Pass 1: per-core partial layer-1 BN statistics of z1 = x @ W1."""
    c, i = pl.program_id(0), pl.program_id(1)
    z1 = jnp.dot(x_ref[...].astype(mxu_dtype), w1_ref[...],
                 preferred_element_type=jnp.float32)
    _stats_accumulate(stats1_ref, z1, i, (c * nbpc + i) * tile, batch=batch, tile=tile)


def _pass2_kernel(x_ref, w1_ref, gb1_ref, stats1_ref, w2_ref, stats2_ref,
                  *, batch, tile, nbpc, inv_batch, mxu_dtype):
    """Pass 2: recompute z1, BN1+ReLU, per-core partial layer-2 stats of z2."""
    c, i = pl.program_id(0), pl.program_id(1)
    z1 = jnp.dot(x_ref[...].astype(mxu_dtype), w1_ref[...],
                 preferred_element_type=jnp.float32)
    h1 = _bn_relu(z1, jnp.sum(stats1_ref[...], axis=0), gb1_ref[...], inv_batch)
    z2 = jnp.dot(h1.astype(mxu_dtype), w2_ref[...],
                 preferred_element_type=jnp.float32)
    _stats_accumulate(stats2_ref, z2, i, (c * nbpc + i) * tile, batch=batch, tile=tile)


def _pass3_kernel(x_ref, w1_ref, gb1_ref, stats1_ref, w2_ref, gb2_ref, stats2_ref,
                  wo_ref, bo_ref, out_ref, *, inv_batch, mxu_dtype):
    """Pass 3: recompute, apply both BNs + ReLU, final Linear, write out."""
    z1 = jnp.dot(x_ref[...].astype(mxu_dtype), w1_ref[...],
                 preferred_element_type=jnp.float32)
    h1 = _bn_relu(z1, jnp.sum(stats1_ref[...], axis=0), gb1_ref[...], inv_batch)
    z2 = jnp.dot(h1.astype(mxu_dtype), w2_ref[...],
                 preferred_element_type=jnp.float32)
    h2 = _bn_relu(z2, jnp.sum(stats2_ref[...], axis=0), gb2_ref[...], inv_batch)
    out = jnp.dot(h2.astype(mxu_dtype), wo_ref[...],
                  preferred_element_type=jnp.float32) + bo_ref[...]
    out_ref[...] = out.astype(out_ref.dtype)


# ------------------------------ Wrapper ------------------------------------ #
def encoder_forward(x, params, *, fused_max_rows=None, tile_batch=16384,
                    mxu_dtype=jnp.bfloat16):
    """Encoder forward. x: [B, n_features] float32; weights pre-transposed
    as [in_features, out_features]. Set mxu_dtype=jnp.float32 for exact fp32
    matmul operands."""
    B, F = x.shape
    H1 = params["w1"].shape[1]
    H2 = params["w2"].shape[1]
    L = params["wo"].shape[1]
    msize = jnp.dtype(mxu_dtype).itemsize
    budget = _vmem_budget_bytes()

    if fused_max_rows is None:
        # Per-row VMEM in the fused kernel: x (mxu dtype) + z/h per hidden layer
        # (f32) + out (f32), with 3x headroom for compiler temps / copies.
        per_row = F * msize + 4 * (2 * H1 + 2 * H2 + 2 * L)
        fused_max_rows = int(min(65536, max(1024, budget // (3 * per_row))))

    # Tiny grid-invariant operands: cast/pack once in the wrapper.
    w1 = params["w1"].astype(mxu_dtype)
    w2 = params["w2"].astype(mxu_dtype)
    wo = params["wo"].astype(mxu_dtype)
    gb1 = jnp.concatenate([params["g1"], params["beta1"]], axis=0)   # [2, H1]
    gb2 = jnp.concatenate([params["g2"], params["beta2"]], axis=0)   # [2, H2]
    bo = params["bo"]

    inv_batch = 1.0 / B
    param_bytes = (F * H1 + H1 * H2 + H2 * L) * msize + (2 * H1 + 2 * H2 + L) * 4
    total_flops = 2 * B * (F * H1 + H1 * H2 + H2 * L)

    if B <= fused_max_rows:
        # ---- fused single-launch path: one read of x, one write of out ---- #
        # x stays f32 here; the mxu_dtype cast happens in-kernel (VPU slack).
        vmem = pl.BlockSpec(memory_space=pltpu.MemorySpace.VMEM)
        kernel = functools.partial(_fused_encoder_kernel,
                                   inv_batch=inv_batch, mxu_dtype=mxu_dtype)
        return pl.pallas_call(
            kernel,
            out_shape=jax.ShapeDtypeStruct((B, L), jnp.float32),
            in_specs=[vmem] * 7,
            out_specs=vmem,
            compiler_params=pltpu.CompilerParams(vmem_limit_bytes=budget),
            cost_estimate=_cost(flops=total_flops, transcendentals=2 * (H1 + H2),
                                bytes_accessed=B * F * 4 + param_bytes + B * L * 4),
        )(x, w1, gb1, w2, gb2, wo, bo)

    # ---- batch-tiled 3-pass path (global BN stats, x re-read 3x, no z1/z2 HBM) --- #
    # Single wrapper cast of x amortizes over the three reads.
    xc = x.astype(mxu_dtype)
    sublane = 16 if msize < 4 else 8                 # bf16 packs 2 rows per sublane
    tb = _round_up(max(sublane, min(tile_batch, B)), sublane)
    nbpc = _cdiv(_cdiv(B, tb), _NCORES)              # grid steps per core
    b_pad = _NCORES * nbpc * tb
    if b_pad != B:
        xc = jnp.pad(xc, ((0, b_pad - B), (0, 0)))

    grid = (_NCORES, nbpc)
    reduce_params = pltpu.CompilerParams(            # per-core stats accumulation
        dimension_semantics=("parallel", "arbitrary"), vmem_limit_bytes=budget)
    apply_params = pltpu.CompilerParams(             # pure map
        dimension_semantics=("parallel", "parallel"), vmem_limit_bytes=budget)

    x_spec = pl.BlockSpec((tb, F), lambda c, i: (c * nbpc + i, 0))
    out_spec = pl.BlockSpec((tb, L), lambda c, i: (c * nbpc + i, 0))
    const = lambda shape: pl.BlockSpec(shape, lambda c, i: tuple(0 for _ in shape))
    stats_out = lambda H: pl.BlockSpec((1, 2, H), lambda c, i: (c, 0, 0))

    # Pass 1: per-core partial layer-1 BN statistics.
    stats1 = pl.pallas_call(
        functools.partial(_pass1_kernel, batch=B, tile=tb, nbpc=nbpc,
                          mxu_dtype=mxu_dtype),
        grid=grid,
        in_specs=[x_spec, const((F, H1))],
        out_specs=stats_out(H1),
        out_shape=jax.ShapeDtypeStruct((_NCORES, 2, H1), jnp.float32),
        compiler_params=reduce_params,
        cost_estimate=_cost(
            flops=2 * b_pad * F * H1,
            bytes_accessed=b_pad * F * msize + F * H1 * msize + _NCORES * 2 * H1 * 4),
    )(xc, w1)

    # Pass 2: recompute z1, BN1+ReLU, per-core partial layer-2 stats.
    stats2 = pl.pallas_call(
        functools.partial(_pass2_kernel, batch=B, tile=tb, nbpc=nbpc,
                          inv_batch=inv_batch, mxu_dtype=mxu_dtype),
        grid=grid,
        in_specs=[x_spec, const((F, H1)), const((2, H1)),
                  const((_NCORES, 2, H1)), const((H1, H2))],
        out_specs=stats_out(H2),
        out_shape=jax.ShapeDtypeStruct((_NCORES, 2, H2), jnp.float32),
        compiler_params=reduce_params,
        cost_estimate=_cost(
            flops=2 * b_pad * (F * H1 + H1 * H2), transcendentals=H1,
            bytes_accessed=b_pad * F * msize + (F * H1 + H1 * H2) * msize
            + _NCORES * 2 * (H1 + H2) * 4 + 2 * H1 * 4),
    )(xc, w1, gb1, stats1, w2)

    # Pass 3: recompute, apply BN1/BN2 + ReLU, final Linear, write out.
    out = pl.pallas_call(
        functools.partial(_pass3_kernel, inv_batch=inv_batch, mxu_dtype=mxu_dtype),
        grid=grid,
        in_specs=[x_spec, const((F, H1)), const((2, H1)), const((_NCORES, 2, H1)),
                  const((H1, H2)), const((2, H2)), const((_NCORES, 2, H2)),
                  const((H2, L)), const((1, L))],
        out_specs=out_spec,
        out_shape=jax.ShapeDtypeStruct((b_pad, L), jnp.float32),
        compiler_params=apply_params,
        cost_estimate=_cost(
            flops=2 * b_pad * (F * H1 + H1 * H2 + H2 * L),
            transcendentals=H1 + H2,
            bytes_accessed=b_pad * F * msize + param_bytes
            + _NCORES * 2 * (H1 + H2) * 4 + b_pad * L * 4),
    )(xc, w1, gb1, stats1, w2, gb2, stats2, wo, bo)

    # TODO(synk): the (B, L=8) output store is lane-sparse (masked vst); a lane-dense
    # (b_pad//16, 128) repack is a pure row-major reshape and a secondary store-path
    # win once HBM traffic is the only remaining cost — not done here.
    return out[:B]


# --------------------------- Pure-JAX references --------------------------- #
def encoder_reference_f32(x, params):
    """Exact fp32 train-mode semantics of the torch module (with b1/b2)."""
    def hidden(h, w, b, g, beta):
        z = h @ w + b
        mu = jnp.mean(z, axis=0, keepdims=True)
        var = jnp.mean((z - mu) ** 2, axis=0, keepdims=True)
        return jnp.maximum((z - mu) / jnp.sqrt(var + EPS) * g + beta, 0.0)

    h = hidden(x, params["w1"], params["b1"], params["g1"], params["beta1"])
    h = hidden(h, params["w2"], params["b2"], params["g2"], params["beta2"])
    return h @ params["wo"] + params["bo"]


def encoder_reference_mimic(x, params, mxu_dtype=jnp.bfloat16):
    """Mirrors the kernel's dtype pipeline (bf16 MXU operands, f32 accumulation,
    no pre-BN bias, E[z^2]-E[z]^2 variance)."""
    def mm(a, w):
        return jnp.dot(a.astype(mxu_dtype), w.astype(mxu_dtype),
                       preferred_element_type=jnp.float32)

    def hidden(h, w, g, beta):
        z = mm(h, w)
        mu = jnp.mean(z, axis=0, keepdims=True)
        var = jnp.maximum(jnp.mean(z * z, axis=0, keepdims=True) - mu * mu, 0.0)
        return jnp.maximum((z - mu) * lax.rsqrt(var + EPS) * g + beta, 0.0)

    h = hidden(x, params["w1"], params["g1"], params["beta1"])
    h = hidden(h, params["w2"], params["g2"], params["beta2"])
    return mm(h, params["wo"]) + params["bo"]


# ---------------------------- Param init ------------------------------------ #
def init_params(key, n_features, hidden_sizes, latent_size):
    assert len(hidden_sizes) == 2, "script hardcodes two hidden layers"
    h1, h2 = hidden_sizes
    ks = jax.random.split(key, 10)

    def linear(kw, kb, fan_in, fan_out):
        bound = fan_in ** -0.5
        w = jax.random.uniform(kw, (fan_in, fan_out), jnp.float32, -bound, bound)
        b = jax.random.uniform(kb, (1, fan_out), jnp.float32, -bound, bound)
        return w, b

    w1, b1 = linear(ks[0], ks[1], n_features, h1)
    w2, b2 = linear(ks[2], ks[3], h1, h2)
    wo, bo = linear(ks[4], ks[5], h2, latent_size)
    # Non-trivial BN affine params to exercise the gamma/beta packing.
    g1 = jax.random.uniform(ks[6], (1, h1), jnp.float32, 0.5, 1.5)
    beta1 = 0.1 * jax.random.normal(ks[7], (1, h1), jnp.float32)
    g2 = jax.random.uniform(ks[8], (1, h2), jnp.float32, 0.5, 1.5)
    beta2 = 0.1 * jax.random.normal(ks[9], (1, h2), jnp.float32)

    return dict(w1=w1, b1=b1, g1=g1, beta1=beta1,
                w2=w2, b2=b2, g2=g2, beta2=beta2,
                wo=wo, bo=bo)


if __name__ == "__main__":
    # Config: n_features=16, hidden_sizes=[32, 32], n_basis=8, dynamic_bias=False
    # => latent_size = 8; dropout_p = 0.0 (train-mode forward).
    n_features, hidden_sizes, n_basis = 16, [32, 32], 8
    latent_size = n_basis  # + is_dynamic_bias_enabled(config) == 0

    key = jax.random.PRNGKey(0)
    kx1, kx2, kp = jax.random.split(key, 3)
    params = init_params(kp, n_features, hidden_sizes, latent_size)

    # Small batch -> fused single-launch path.
    x_small = jax.random.normal(kx1, (28, n_features), jnp.float32)
    out_fused = jax.block_until_ready(encoder_forward(x_small, params))

    # Larger batch with a tiny tile + disabled fused path -> forces the 3-pass
    # tiled path (exercises per-core partial stats, batch padding, row masking).
    x_big = jax.random.normal(kx2, (200, n_features), jnp.float32)
    out_tiled = jax.block_until_ready(
        encoder_forward(x_big, params, fused_max_rows=0, tile_batch=16))
    out_big_fused = jax.block_until_ready(encoder_forward(x_big, params))

    assert out_fused.shape == (28, latent_size)
    assert out_tiled.shape == (200, latent_size)
    assert out_big_fused.shape == (200, latent_size)

    ref_small = encoder_reference_mimic(x_small, params)
    ref_big = encoder_reference_mimic(x_big, params)
    ref_small_f32 = encoder_reference_f32(x_small, params)

    assert jnp.allclose(out_fused, ref_small, atol=2e-3, rtol=2e-3), \
        f"fused path mismatch: {jnp.max(jnp.abs(out_fused - ref_small))}"
    assert jnp.allclose(out_tiled, ref_big, atol=2e-3, rtol=2e-3), \
        f"tiled path mismatch: {jnp.max(jnp.abs(out_tiled - ref_big))}"
    assert jnp.allclose(out_big_fused, out_tiled, atol=2e-3, rtol=2e-3), \
        f"fused/tiled disagreement: {jnp.max(jnp.abs(out_big_fused - out_tiled))}"
    # bf16 MXU operands vs exact fp32 module semantics (loose tolerance; also
    # proves the dropped pre-BN biases b1/b2 are train-mode no-ops).
    assert jnp.allclose(out_fused, ref_small_f32, atol=1e-1, rtol=1e-1), \
        f"fp32-semantics drift too large: {jnp.max(jnp.abs(out_fused - ref_small_f32))}"

    print("KERNEL_OK")
</pallas_src>

<mosaic_0001>
module attributes {stable_mosaic.version = 11 : i64} {
  func.func @_fused_encoder_kernel(%arg0: memref<28x16xf32, #tpu.memory_space<vmem>>, %arg1: memref<16x32xbf16, #tpu.memory_space<vmem>>, %arg2: memref<2x32xf32, #tpu.memory_space<vmem>>, %arg3: memref<32x32xbf16, #tpu.memory_space<vmem>>, %arg4: memref<2x32xf32, #tpu.memory_space<vmem>>, %arg5: memref<32x8xbf16, #tpu.memory_space<vmem>>, %arg6: memref<1x8xf32, #tpu.memory_space<vmem>>, %arg7: memref<28x8xf32, #tpu.memory_space<vmem>>) attributes {dimension_semantics = [], scalar_prefetch = 0 : i64, scratch_operands = 0 : i64, tpu.core_type = #tpu.core_type<tc>} {
    %c0 = arith.constant 0 : index
    %c0_0 = arith.constant 0 : index
    %0 = vector.load %arg0[%c0, %c0_0] : memref<28x16xf32, #tpu.memory_space<vmem>>, vector<28x16xf32>
    %1 = arith.truncf %0 : vector<28x16xf32> to vector<28x16xbf16>
    %c0_1 = arith.constant 0 : index
    %c0_2 = arith.constant 0 : index
    %2 = vector.load %arg1[%c0_1, %c0_2] : memref<16x32xbf16, #tpu.memory_space<vmem>>, vector<16x32xbf16>
    %cst = arith.constant dense<0.000000e+00> : vector<28x32xf32>
    %3 = tpu.matmul %1, %2, %cst {dimension_numbers = #tpu.dot_dimension_numbers<[1], [0], [0], [1], [0, 0, 1, 1], [], []>} : vector<28x16xbf16>, vector<16x32xbf16>, vector<28x32xf32> -> vector<28x32xf32>
    %cst_3 = arith.constant dense<0.000000e+00> : vector<32xf32>
    %4 = vector.multi_reduction <add>, %3, %cst_3 [0] : vector<28x32xf32> to vector<32xf32>
    %5 = vector.shape_cast %4 : vector<32xf32> to vector<1x32xf32>
    %6 = arith.mulf %3, %3 : vector<28x32xf32>
    %cst_4 = arith.constant dense<0.000000e+00> : vector<32xf32>
    %7 = vector.multi_reduction <add>, %6, %cst_4 [0] : vector<28x32xf32> to vector<32xf32>
    %8 = vector.shape_cast %7 : vector<32xf32> to vector<1x32xf32>
    %9 = tpu.iota {dimensions = array<i32: 0>} : vector<2x1xi32>
    %c0_i32 = arith.constant 0 : i32
    %10 = vector.broadcast %c0_i32 : i32 to vector<2x1xi32>
    %11 = arith.cmpi eq, %9, %10 : vector<2x1xi32>
    %12 = vector.shape_cast %11 : vector<2x1xi1> to vector<2x1xi1>
    %13 = vector.broadcast %12 : vector<2x1xi1> to vector<2x32xi1>
    %14 = vector.shape_cast %5 : vector<1x32xf32> to vector<1x32xf32>
    %15 = vector.broadcast %14 : vector<1x32xf32> to vector<2x32xf32>
    %16 = vector.shape_cast %8 : vector<1x32xf32> to vector<1x32xf32>
    %17 = vector.broadcast %16 : vector<1x32xf32> to vector<2x32xf32>
    %18 = arith.select %13, %15, %17 : vector<2x32xi1>, vector<2x32xf32>
    %c0_5 = arith.constant 0 : index
    %c0_6 = arith.constant 0 : index
    %19 = vector.load %arg2[%c0_5, %c0_6] : memref<2x32xf32, #tpu.memory_space<vmem>>, vector<2x32xf32>
    %20 = vector.extract_strided_slice %18 {offsets = [0, 0], sizes = [1, 32], strides = [1, 1]} : vector<2x32xf32> to vector<1x32xf32>
    %cst_7 = arith.constant 0.0357142873 : f32
    %21 = vector.broadcast %cst_7 : f32 to vector<1x32xf32>
    %22 = arith.mulf %20, %21 : vector<1x32xf32>
    %23 = vector.extract_strided_slice %18 {offsets = [1, 0], sizes = [1, 32], strides = [1, 1]} : vector<2x32xf32> to vector<1x32xf32>
    %cst_8 = arith.constant 0.0357142873 : f32
    %24 = vector.broadcast %cst_8 : f32 to vector<1x32xf32>
    %25 = arith.mulf %23, %24 : vector<1x32xf32>
    %26 = arith.mulf %22, %22 : vector<1x32xf32>
    %27 = arith.subf %25, %26 : vector<1x32xf32>
    %cst_9 = arith.constant 0.000000e+00 : f32
    %28 = vector.broadcast %cst_9 : f32 to vector<1x32xf32>
    %29 = arith.maximumf %27, %28 : vector<1x32xf32>
    %30 = vector.broadcast %22 : vector<1x32xf32> to vector<28x32xf32>
    %31 = arith.subf %3, %30 : vector<28x32xf32>
    %cst_10 = arith.constant 9.99999974E-6 : f32
    %32 = vector.broadcast %cst_10 : f32 to vector<1x32xf32>
    %33 = arith.addf %29, %32 : vector<1x32xf32>
    %34 = math.rsqrt %33 : vector<1x32xf32>
    %35 = vector.broadcast %34 : vector<1x32xf32> to vector<28x32xf32>
    %36 = arith.mulf %31, %35 : vector<28x32xf32>
    %37 = vector.extract_strided_slice %19 {offsets = [0, 0], sizes = [1, 32], strides = [1, 1]} : vector<2x32xf32> to vector<1x32xf32>
    %38 = vector.broadcast %37 : vector<1x32xf32> to vector<28x32xf32>
    %39 = arith.mulf %36, %38 : vector<28x32xf32>
    %40 = vector.extract_strided_slice %19 {offsets = [1, 0], sizes = [1, 32], strides = [1, 1]} : vector<2x32xf32> to vector<1x32xf32>
    %41 = vector.broadcast %40 : vector<1x32xf32> to vector<28x32xf32>
    %42 = arith.addf %39, %41 : vector<28x32xf32>
    %cst_11 = arith.constant 0.000000e+00 : f32
    %43 = vector.broadcast %cst_11 : f32 to vector<28x32xf32>
    %44 = arith.maximumf %42, %43 : vector<28x32xf32>
    %45 = arith.truncf %44 : vector<28x32xf32> to vector<28x32xbf16>
    %c0_12 = arith.constant 0 : index
    %c0_13 = arith.constant 0 : index
    %46 = vector.load %arg3[%c0_12, %c0_13] : memref<32x32xbf16, #tpu.memory_space<vmem>>, vector<32x32xbf16>
    %cst_14 = arith.constant dense<0.000000e+00> : vector<28x32xf32>
    %47 = tpu.matmul %45, %46, %cst_14 {dimension_numbers = #tpu.dot_dimension_numbers<[1], [0], [0], [1], [0, 0, 1, 1], [], []>} : vector<28x32xbf16>, vector<32x32xbf16>, vector<28x32xf32> -> vector<28x32xf32>
    %cst_15 = arith.constant dense<0.000000e+00> : vector<32xf32>
    %48 = vector.multi_reduction <add>, %47, %cst_15 [0] : vector<28x32xf32> to vector<32xf32>
    %49 = vector.shape_cast %48 : vector<32xf32> to vector<1x32xf32>
    %50 = arith.mulf %47, %47 : vector<28x32xf32>
    %cst_16 = arith.constant dense<0.000000e+00> : vector<32xf32>
    %51 = vector.multi_reduction <add>, %50, %cst_16 [0] : vector<28x32xf32> to vector<32xf32>
    %52 = vector.shape_cast %51 : vector<32xf32> to vector<1x32xf32>
    %53 = tpu.iota {dimensions = array<i32: 0>} : vector<2x1xi32>
    %c0_i32_17 = arith.constant 0 : i32
    %54 = vector.broadcast %c0_i32_17 : i32 to vector<2x1xi32>
    %55 = arith.cmpi eq, %53, %54 : vector<2x1xi32>
    %56 = vector.shape_cast %55 : vector<2x1xi1> to vector<2x1xi1>
    %57 = vector.broadcast %56 : vector<2x1xi1> to vector<2x32xi1>
    %58 = vector.shape_cast %49 : vector<1x32xf32> to vector<1x32xf32>
    %59 = vector.broadcast %58 : vector<1x32xf32> to vector<2x32xf32>
    %60 = vector.shape_cast %52 : vector<1x32xf32> to vector<1x32xf32>
    %61 = vector.broadcast %60 : vector<1x32xf32> to vector<2x32xf32>
    %62 = arith.select %57, %59, %61 : vector<2x32xi1>, vector<2x32xf32>
    %c0_18 = arith.constant 0 : index
    %c0_19 = arith.constant 0 : index
    %63 = vector.load %arg4[%c0_18, %c0_19] : memref<2x32xf32, #tpu.memory_space<vmem>>, vector<2x32xf32>
    %64 = vector.extract_strided_slice %62 {offsets = [0, 0], sizes = [1, 32], strides = [1, 1]} : vector<2x32xf32> to vector<1x32xf32>
    %cst_20 = arith.constant 0.0357142873 : f32
    %65 = vector.broadcast %cst_20 : f32 to vector<1x32xf32>
    %66 = arith.mulf %64, %65 : vector<1x32xf32>
    %67 = vector.extract_strided_slice %62 {offsets = [1, 0], sizes = [1, 32], strides = [1, 1]} : vector<2x32xf32> to vector<1x32xf32>
    %cst_21 = arith.constant 0.0357142873 : f32
    %68 = vector.broadcast %cst_21 : f32 to vector<1x32xf32>
    %69 = arith.mulf %67, %68 : vector<1x32xf32>
    %70 = arith.mulf %66, %66 : vector<1x32xf32>
    %71 = arith.subf %69, %70 : vector<1x32xf32>
    %cst_22 = arith.constant 0.000000e+00 : f32
    %72 = vector.broadcast %cst_22 : f32 to vector<1x32xf32>
    %73 = arith.maximumf %71, %72 : vector<1x32xf32>
    %74 = vector.broadcast %66 : vector<1x32xf32> to vector<28x32xf32>
    %75 = arith.subf %47, %74 : vector<28x32xf32>
    %cst_23 = arith.constant 9.99999974E-6 : f32
    %76 = vector.broadcast %cst_23 : f32 to vector<1x32xf32>
    %77 = arith.addf %73, %76 : vector<1x32xf32>
    %78 = math.rsqrt %77 : vector<1x32xf32>
    %79 = vector.broadcast %78 : vector<1x32xf32> to vector<28x32xf32>
    %80 = arith.mulf %75, %79 : vector<28x32xf32>
    %81 = vector.extract_strided_slice %63 {offsets = [0, 0], sizes = [1, 32], strides = [1, 1]} : vector<2x32xf32> to vector<1x32xf32>
    %82 = vector.broadcast %81 : vector<1x32xf32> to vector<28x32xf32>
    %83 = arith.mulf %80, %82 : vector<28x32xf32>
    %84 = vector.extract_strided_slice %63 {offsets = [1, 0], sizes = [1, 32], strides = [1, 1]} : vector<2x32xf32> to vector<1x32xf32>
    %85 = vector.broadcast %84 : vector<1x32xf32> to vector<28x32xf32>
    %86 = arith.addf %83, %85 : vector<28x32xf32>
    %cst_24 = arith.constant 0.000000e+00 : f32
    %87 = vector.broadcast %cst_24 : f32 to vector<28x32xf32>
    %88 = arith.maximumf %86, %87 : vector<28x32xf32>
    %89 = arith.truncf %88 : vector<28x32xf32> to vector<28x32xbf16>
    %c0_25 = arith.constant 0 : index
    %c0_26 = arith.constant 0 : index
    %90 = vector.load %arg5[%c0_25, %c0_26] : memref<32x8xbf16, #tpu.memory_space<vmem>>, vector<32x8xbf16>
    %cst_27 = arith.constant dense<0.000000e+00> : vector<28x8xf32>
    %91 = tpu.matmul %89, %90, %cst_27 {dimension_numbers = #tpu.dot_dimension_numbers<[1], [0], [0], [1], [0, 0, 1, 1], [], []>} : vector<28x32xbf16>, vector<32x8xbf16>, vector<28x8xf32> -> vector<28x8xf32>
    %c0_28 = arith.constant 0 : index
    %c0_29 = arith.constant 0 : index
    %92 = vector.load %arg6[%c0_28, %c0_29] : memref<1x8xf32, #tpu.memory_space<vmem>>, vector<1x8xf32>
    %93 = vector.broadcast %92 : vector<1x8xf32> to vector<28x8xf32>
    %94 = arith.addf %91, %93 : vector<28x8xf32>
    %c0_30 = arith.constant 0 : index
    %c0_31 = arith.constant 0 : index
    %95 = vector.load %arg7[%c0_30, %c0_31] : memref<28x8xf32, #tpu.memory_space<vmem>>, vector<28x8xf32>
    tpu.vector_store %arg7[%c0_30, %c0_31], %94 {strides = array<i32>} : memref<28x8xf32, #tpu.memory_space<vmem>>, vector<28x8xf32>,
    return
  }
}

</mosaic_0001>

<llo_original>
// kernel: tpu_custom_call.1
$region0: #{tpu_custom_call.1}
  #allocation0 [shape = 'u32[]', space=smem, size = 0x4, offset = 0x4, fixed_abs, tag = 'smem constant byte address 0x4 - core index']
  #allocation1 [shape = 'u32[144,128]{1,0:T(1,128)}', space=vmem, size = 0x12000, scoped, tag = 'internal scratch']
  %s0 = inlined_call_operand.vmem [shape: f32[28,16], index: 0, kind: input, shape index: {}]
  %s1 = inlined_call_operand.vmem [shape: bf16[16,32], index: 1, kind: input, shape index: {}]
  %s2 = inlined_call_operand.vmem [shape: f32[2,32], index: 2, kind: input, shape index: {}]
  %s3 = inlined_call_operand.vmem [shape: bf16[32,32], index: 3, kind: input, shape index: {}]
  %s4 = inlined_call_operand.vmem [shape: f32[2,32], index: 4, kind: input, shape index: {}]
  %s5 = inlined_call_operand.vmem [shape: bf16[32,8], index: 5, kind: input, shape index: {}]
  %s6 = inlined_call_operand.vmem [shape: f32[1,8], index: 6, kind: input, shape index: {}]
  %s7 = inlined_call_operand.vmem [shape: f32[28,8], index: 7, kind: output, shape index: {}]
  %s8 = sld [smem:[#allocation0]]
  $region38: #{tpu_custom_call.1} parent=0
    _
  %s10 = ssub.s32 1, %s8
  %s11 = scalar_select 0, %s10, %s8
  // Predicated region
  $region2: #{tpu_custom_call.1} parent=0 // pred_check
    _
  $region3: #{tpu_custom_call.1} parent=0 // pred_check_branch
    %13 = sbr.rel (0) target = $region5
  $region4: #{tpu_custom_call.1} parent=0 // pred_region
    _
  $region5: #{tpu_custom_call.1} parent=0 // pred_fallthru
    _
  // Predicated region
  $region6: #{tpu_custom_call.1} parent=0 // pred_check
    _
  $region7: #{tpu_custom_call.1} parent=0 // pred_check_branch
    %15 = sbr.rel (0) target = $region9
  $region8: #{tpu_custom_call.1} parent=0 // pred_region
    _
  $region9: #{tpu_custom_call.1} parent=0 // pred_fallthru
    _
  // Predicated region
  $region10: #{tpu_custom_call.1} parent=0 // pred_check
    _
  $region11: #{tpu_custom_call.1} parent=0 // pred_check_branch
    %17 = sbr.rel (0) target = $region13
  $region12: #{tpu_custom_call.1} parent=0 // pred_region
    _
  $region13: #{tpu_custom_call.1} parent=0 // pred_fallthru
    _
  // Predicated region
  $region14: #{tpu_custom_call.1} parent=0 // pred_check
    _
  $region15: #{tpu_custom_call.1} parent=0 // pred_check_branch
    %19 = sbr.rel (0) target = $region17
  $region16: #{tpu_custom_call.1} parent=0 // pred_region
    _
  $region17: #{tpu_custom_call.1} parent=0 // pred_fallthru
    _
  // Predicated region
  $region18: #{tpu_custom_call.1} parent=0 // pred_check
    _
  $region19: #{tpu_custom_call.1} parent=0 // pred_check_branch
    %21 = sbr.rel (0) target = $region21
  $region20: #{tpu_custom_call.1} parent=0 // pred_region
    _
  $region21: #{tpu_custom_call.1} parent=0 // pred_fallthru
    _
  // Predicated region
  $region22: #{tpu_custom_call.1} parent=0 // pred_check
    _
  $region23: #{tpu_custom_call.1} parent=0 // pred_check_branch
    %23 = sbr.rel (0) target = $region25
  $region24: #{tpu_custom_call.1} parent=0 // pred_region
    _
  $region25: #{tpu_custom_call.1} parent=0 // pred_fallthru
    _
  // Predicated region
  $region26: #{tpu_custom_call.1} parent=0 // pred_check
    _
  $region27: #{tpu_custom_call.1} parent=0 // pred_check_branch
    %25 = sbr.rel (0) target = $region29
  $region28: #{tpu_custom_call.1} parent=0 // pred_region
    _
  $region29: #{tpu_custom_call.1} parent=0 // pred_fallthru
    _
  %v27 = vld [vmem:[%s0] sm:$0xff]
  %v28 = vld [vmem:[%s0 + $0x8] sm:$0xff]
  %v29 = vld [vmem:[%s0 + $0x10] sm:$0xff]
  %v30 = vld [vmem:[%s0 + $0x18] sm:$0xf]
  %v31 = vpack.c.bf16 %v28, %v27
  %v32 = vpack.c.bf16 %v30, %v29
  %v33 = vld [vmem:[%s1] sm:$0xf]
  %v34 = vld [vmem:[%s1 + $0x4] sm:$0xf]
  %v37 = vunpack.c.l.b16 %v33
  %v38 = vunpack.c.l.b16 %v34
  %v39 = vpack.c.b16 %v38, %v37
  %vm41 = vcmask 130048
  %v43 = vsel %vm41, %v31, 0
  %v46 = vsel %vm41, %v32, 0
  %48 = vmatprep.subr.bf16.mxu0 0
  %49 = vmatpush1.bf16.msra.mxu0 %v39
  %50 = vmatprep.subr.bf16.mxu0 0
  %51 = vmatpush1.bf16.msra.mxu0 0
  %52 = vmatprep.subr.bf16.mxu0 0
  %53 = vmatpush1.bf16.msra.mxu0 0
  %54 = vmatprep.subr.bf16.mxu0 0
  %55 = vmatpush1.bf16.msra.mxu0 0
  %56 = vmatprep.subr.bf16.mxu0 0
  %57 = vmatpush1.bf16.msra.mxu0 0
  %58 = vmatprep.subr.bf16.mxu0 0
  %59 = vmatpush1.bf16.msra.mxu0 0
  %60 = vmatprep.subr.bf16.mxu0 0
  %61 = vmatpush1.bf16.msra.mxu0 0
  %62 = vmatprep.subr.bf16.mxu0 0
  %63 = vmatpush1.bf16.msra.mxu0 0
  %64 = vmatprep.subr.bf16.mxu0 0
  %65 = vmatpush1.bf16.msra.mxu0 0
  %66 = vmatprep.subr.bf16.mxu0 0
  %67 = vmatpush1.bf16.msra.mxu0 0
  %68 = vmatprep.subr.bf16.mxu0 0
  %69 = vmatpush1.bf16.msra.mxu0 0
  %70 = vmatprep.subr.bf16.mxu0 0
  %71 = vmatpush1.bf16.msra.mxu0 0
  %72 = vmatprep.subr.bf16.mxu0 0
  %73 = vmatpush1.bf16.msra.mxu0 0
  %74 = vmatprep.subr.bf16.mxu0 0
  %75 = vmatpush1.bf16.msra.mxu0 0
  %76 = vmatprep.subr.bf16.mxu0 0
  %77 = vmatpush1.bf16.msra.mxu0 0
  %78 = vmatprep.subr.bf16.mxu0 0
  %79 = vmatpush1.bf16.msra.mxu0 0
  %80 = vmatprep.mubr.bf16.mxu0 0
  %81 = vmatmul.mubr.bf16.gmra.mrb[0].mxu0 %v43
  %v82 = vpop.f32.mrb[0].mxu0
  %v83 = vadd.f32 0.0, %v82
  %v84 = vpop.f32.mrb[0].mxu0
  %v85 = vpop.f32.mrb[0].mxu0
  %v86 = vadd.f32 0.0, %v85
  %v87 = vpop.f32.mrb[0].mxu0
  %88 = vmatprep.mubr.bf16.mxu0 0
  %89 = vmatmul.mubr.bf16.gmra.mrb[0].mxu0 %v46
  %v90 = vpop.f32.mrb[0].mxu0
  %v91 = vadd.f32 0.0, %v90
  %v92 = vpop.f32.mrb[0].mxu0
  %v93 = vpop.f32.mrb[0].mxu0
  %v94 = vadd.f32 0.0, %v93
  %v95 = vpop.f32.mrb[0].mxu0
  %96 = vdwg.mxu0
  %vm97 = vcmask 261120
  %v98 = vsel %vm97, %v83, 0.0
  %v99 = vsel %vm97, %v86, 0.0
  %v100 = vadd.f32 %v98, %v99
  %v101 = vsel %vm97, %v91, 0.0
  %v102 = vadd.f32 %v100, %v101
  %vm103 = vcmask 257024
  %v104 = vsel %vm103, %v94, 0.0
  %v105 = vadd.f32 %v102, %v104
  %v106 = vrot.slane %v105, 4
  %v107 = vadd.f32 %v105, %v106
  %v108 = vrot.slane %v107, 2
  %v109 = vadd.f32 %v107, %v108
  %v110 = vrot.slane %v109, 1
  %v111 = vadd.f32 %v109, %v110
  %v112 = vmul.f32 %v83, %v83
  %v113 = vmul.f32 %v86, %v86
  %v114 = vmul.f32 %v91, %v91
  %v115 = vmul.f32 %v94, %v94
  %v116 = vsel %vm97, %v112, 0.0
  %v117 = vsel %vm97, %v113, 0.0
  %v118 = vadd.f32 %v116, %v117
  %v119 = vsel %vm97, %v114, 0.0
  %v120 = vadd.f32 %v118, %v119
  %v121 = vsel %vm103, %v115, 0.0
  %v122 = vadd.f32 %v120, %v121
  %v123 = vrot.slane %v122, 4
  %v124 = vadd.f32 %v122, %v123
  %v125 = vrot.slane %v124, 2
  %v126 = vadd.f32 %v124, %v125
  %v127 = vrot.slane %v126, 1
  %v128 = vadd.f32 %v126, %v127
  %v129 = vlaneseq
  %v130 = vshrl.u32 %v129, 7
  %vm131 = vcmp.eq.s32.totalorder %v130, 0
  %v132 = vsel %vm131, 1, 0
  %vm133 = vcmp.eq.s32.totalorder %v132, 1
  %v134 = vsel %vm133, %v111, %v128
  %v135 = vld [vmem:[%s2] sm:$0x3]
  %v136 = vmul.f32 %v134, 0.035714287
  %v137 = vmul.f32 %v136, %v136
  %v139 = vrot.slane %v137, 7
  %v141 = vsub.f32 %v136, %v139
  %v142 = vmax.f32 %v141, 0.0
  %v143 = vlaneseq
  %v144 = vshrl.u32 %v143, 7
  %v145 = vsub.s32 0, %v144
  %v146 = vrot.slane %v136, %v145
  %v147 = vsub.f32 %v83, %v146
  %v148 = vsub.f32 %v86, %v146
  %v149 = vsub.f32 %v91, %v146
  %v150 = vsub.f32 %v94, %v146
  %v151 = vadd.f32 %v142, 1e-05
  %v152 = vrsqrt.pop %v151
  %v153 = vlaneseq
  %v154 = vshrl.u32 %v153, 7
  %v155 = vsub.s32 1, %v154
  %v156 = vrot.slane %v152, %v155
  %v157 = vmul.f32 %v147, %v156
  %v158 = vmul.f32 %v148, %v156
  %v159 = vmul.f32 %v149, %v156
  %v160 = vmul.f32 %v150, %v156
  %v161 = vlaneseq
  %v162 = vshrl.u32 %v161, 7
  %v163 = vsub.s32 0, %v162
  %v164 = vrot.slane %v135, %v163
  %v165 = vmul.f32 %v157, %v164
  %v166 = vmul.f32 %v158, %v164
  %v167 = vmul.f32 %v159, %v164
  %v168 = vmul.f32 %v160, %v164
  %v169 = vlaneseq
  %v170 = vshrl.u32 %v169, 7
  %v171 = vsub.s32 1, %v170
  %v172 = vrot.slane %v135, %v171
  %v173 = vadd.f32 %v165, %v172
  %v174 = vadd.f32 %v166, %v172
  %v175 = vadd.f32 %v167, %v172
  %v176 = vadd.f32 %v168, %v172
  %v177 = vmax.f32 %v173, 0.0
  %v178 = vmax.f32 %v174, 0.0
  %v179 = vmax.f32 %v175, 0.0
  %v180 = vmax.f32 %v176, 0.0
  %v181 = vpack.c.bf16 %v178, %v177
  %v182 = vpack.c.bf16 %v180, %v179
  %v183 = vld [vmem:[%s3] sm:$0xf]
  %v184 = vld [vmem:[%s3 + $0x4] sm:$0xf]
  %v185 = vld [vmem:[%s3 + $0x8] sm:$0xf]
  %v186 = vld [vmem:[%s3 + $0xc] sm:$0xf]
  %v191 = vunpack.c.l.b16 %v183
  %v192 = vunpack.c.l.b16 %v184
  %v193 = vunpack.c.l.b16 %v185
  %v194 = vunpack.c.l.b16 %v186
  %v195 = vpack.c.b16 %v192, %v191
  %v196 = vpack.c.b16 %v194, %v193
  %v200 = vsel %vm97, %v181, 0
  %v203 = vsel %vm97, %v182, 0
  %205 = vmatprep.subr.bf16.mxu0 0
  %206 = vmatpush1.bf16.msra.mxu0 %v195
  %207 = vmatprep.subr.bf16.mxu0 0
  %208 = vmatpush1.bf16.msra.mxu0 %v196
  %209 = vmatprep.subr.bf16.mxu0 0
  %210 = vmatpush1.bf16.msra.mxu0 0
  %211 = vmatprep.subr.bf16.mxu0 0
  %212 = vmatpush1.bf16.msra.mxu0 0
  %213 = vmatprep.subr.bf16.mxu0 0
  %214 = vmatpush1.bf16.msra.mxu0 0
  %215 = vmatprep.subr.bf16.mxu0 0
  %216 = vmatpush1.bf16.msra.mxu0 0
  %217 = vmatprep.subr.bf16.mxu0 0
  %218 = vmatpush1.bf16.msra.mxu0 0
  %219 = vmatprep.subr.bf16.mxu0 0
  %220 = vmatpush1.bf16.msra.mxu0 0
  %221 = vmatprep.subr.bf16.mxu0 0
  %222 = vmatpush1.bf16.msra.mxu0 0
  %223 = vmatprep.subr.bf16.mxu0 0
  %224 = vmatpush1.bf16.msra.mxu0 0
  %225 = vmatprep.subr.bf16.mxu0 0
  %226 = vmatpush1.bf16.msra.mxu0 0
  %227 = vmatprep.subr.bf16.mxu0 0
  %228 = vmatpush1.bf16.msra.mxu0 0
  %229 = vmatprep.subr.bf16.mxu0 0
  %230 = vmatpush1.bf16.msra.mxu0 0
  %231 = vmatprep.subr.bf16.mxu0 0
  %232 = vmatpush1.bf16.msra.mxu0 0
  %233 = vmatprep.subr.bf16.mxu0 0
  %234 = vmatpush1.bf16.msra.mxu0 0
  %235 = vmatprep.subr.bf16.mxu0 0
  %236 = vmatpush1.bf16.msra.mxu0 0
  %237 = vmatprep.mubr.bf16.mxu0 0
  %238 = vmatmul.mubr.bf16.gmra.mrb[0].mxu0 %v200
  %v239 = vpop.f32.mrb[0].mxu0
  %v240 = vadd.f32 0.0, %v239
  %v241 = vpop.f32.mrb[0].mxu0
  %v242 = vpop.f32.mrb[0].mxu0
  %v243 = vadd.f32 0.0, %v242
  %v244 = vpop.f32.mrb[0].mxu0
  %245 = vmatprep.mubr.bf16.mxu0 0
  %246 = vmatmul.mubr.bf16.gmra.mrb[0].mxu0 %v203
  %v247 = vpop.f32.mrb[0].mxu0
  %v248 = vadd.f32 0.0, %v247
  %v249 = vpop.f32.mrb[0].mxu0
  %v250 = vpop.f32.mrb[0].mxu0
  %v251 = vadd.f32 0.0, %v250
  %v252 = vpop.f32.mrb[0].mxu0
  %253 = vdwg.mxu0
  %v254 = vsel %vm97, %v240, 0.0
  %v255 = vsel %vm97, %v243, 0.0
  %v256 = vadd.f32 %v254, %v255
  %v257 = vsel %vm97, %v248, 0.0
  %v258 = vadd.f32 %v256, %v257
  %v259 = vsel %vm103, %v251, 0.0
  %v260 = vadd.f32 %v258, %v259
  %v261 = vrot.slane %v260, 4
  %v262 = vadd.f32 %v260, %v261
  %v263 = vrot.slane %v262, 2
  %v264 = vadd.f32 %v262, %v263
  %v265 = vrot.slane %v264, 1
  %v266 = vadd.f32 %v264, %v265
  %v267 = vmul.f32 %v240, %v240
  %v268 = vmul.f32 %v243, %v243
  %v269 = vmul.f32 %v248, %v248
  %v270 = vmul.f32 %v251, %v251
  %v271 = vsel %vm97, %v267, 0.0
  %v272 = vsel %vm97, %v268, 0.0
  %v273 = vadd.f32 %v271, %v272
  %v274 = vsel %vm97, %v269, 0.0
  %v275 = vadd.f32 %v273, %v274
  %v276 = vsel %vm103, %v270, 0.0
  %v277 = vadd.f32 %v275, %v276
  %v278 = vrot.slane %v277, 4
  %v279 = vadd.f32 %v277, %v278
  %v280 = vrot.slane %v279, 2
  %v281 = vadd.f32 %v279, %v280
  %v282 = vrot.slane %v281, 1
  %v283 = vadd.f32 %v281, %v282
  %v284 = vsel %vm133, %v266, %v283
  %v285 = vld [vmem:[%s4] sm:$0x3]
  %v286 = vmul.f32 %v284, 0.035714287
  %v287 = vmul.f32 %v286, %v286
  %v289 = vrot.slane %v287, 7
  %v291 = vsub.f32 %v286, %v289
  %v292 = vmax.f32 %v291, 0.0
  %v293 = vlaneseq
  %v294 = vshrl.u32 %v293, 7
  %v295 = vsub.s32 0, %v294
  %v296 = vrot.slane %v286, %v295
  %v297 = vsub.f32 %v240, %v296
  %v298 = vsub.f32 %v243, %v296
  %v299 = vsub.f32 %v248, %v296
  %v300 = vsub.f32 %v251, %v296
  %v301 = vadd.f32 %v292, 1e-05
  %v302 = vrsqrt.pop %v301
  %v303 = vlaneseq
  %v304 = vshrl.u32 %v303, 7
  %v305 = vsub.s32 1, %v304
  %v306 = vrot.slane %v302, %v305
  %v307 = vmul.f32 %v297, %v306
  %v308 = vmul.f32 %v298, %v306
  %v309 = vmul.f32 %v299, %v306
  %v310 = vmul.f32 %v300, %v306
  %v311 = vlaneseq
  %v312 = vshrl.u32 %v311, 7
  %v313 = vsub.s32 0, %v312
  %v314 = vrot.slane %v285, %v313
  %v315 = vmul.f32 %v307, %v314
  %v316 = vmul.f32 %v308, %v314
  %v317 = vmul.f32 %v309, %v314
  %v318 = vmul.f32 %v310, %v314
  %v319 = vlaneseq
  %v320 = vshrl.u32 %v319, 7
  %v321 = vsub.s32 1, %v320
  %v322 = vrot.slane %v285, %v321
  %v323 = vadd.f32 %v315, %v322
  %v324 = vadd.f32 %v316, %v322
  %v325 = vadd.f32 %v317, %v322
  %v326 = vadd.f32 %v318, %v322
  %v327 = vmax.f32 %v323, 0.0
  %v328 = vmax.f32 %v324, 0.0
  %v329 = vmax.f32 %v325, 0.0
  %v330 = vmax.f32 %v326, 0.0
  %v331 = vpack.c.bf16 %v328, %v327
  %v332 = vpack.c.bf16 %v330, %v329
  %v333 = vld [vmem:[%s5] sm:$0xf]
  %v334 = vld [vmem:[%s5 + $0x4] sm:$0xf]
  %v335 = vld [vmem:[%s5 + $0x8] sm:$0xf]
  %v336 = vld [vmem:[%s5 + $0xc] sm:$0xf]
  %v337 = vld [vmem:[%s6] sm:$0x1]
  %v339 = vlaneseq
  %v340 = vshrl.u32 %v339, 7
  %v341 = vsub.s32 0, %v340
  %v342 = vrot.slane %v337, %v341
  %v348 = vunpack.c.l.b16 %v333
  %v349 = vunpack.c.l.b16 %v334
  %v350 = vunpack.c.l.b16 %v335
  %v351 = vunpack.c.l.b16 %v336
  %v352 = vpack.c.b16 %v349, %v348
  %v353 = vpack.c.b16 %v351, %v350
  %v357 = vsel %vm97, %v331, 0
  %v360 = vsel %vm97, %v332, 0
  %362 = vmatprep.subr.bf16.mxu0 0
  %363 = vmatpush1.bf16.msra.mxu0 %v352
  %364 = vmatprep.subr.bf16.mxu0 0
  %365 = vmatpush1.bf16.msra.mxu0 %v353
  %366 = vmatprep.subr.bf16.mxu0 0
  %367 = vmatpush1.bf16.msra.mxu0 0
  %368 = vmatprep.subr.bf16.mxu0 0
  %369 = vmatpush1.bf16.msra.mxu0 0
  %370 = vmatprep.subr.bf16.mxu0 0
  %371 = vmatpush1.bf16.msra.mxu0 0
  %372 = vmatprep.subr.bf16.mxu0 0
  %373 = vmatpush1.bf16.msra.mxu0 0
  %374 = vmatprep.subr.bf16.mxu0 0
  %375 = vmatpush1.bf16.msra.mxu0 0
  %376 = vmatprep.subr.bf16.mxu0 0
  %377 = vmatpush1.bf16.msra.mxu0 0
  %378 = vmatprep.subr.bf16.mxu0 0
  %379 = vmatpush1.bf16.msra.mxu0 0
  %380 = vmatprep.subr.bf16.mxu0 0
  %381 = vmatpush1.bf16.msra.mxu0 0
  %382 = vmatprep.subr.bf16.mxu0 0
  %383 = vmatpush1.bf16.msra.mxu0 0
  %384 = vmatprep.subr.bf16.mxu0 0
  %385 = vmatpush1.bf16.msra.mxu0 0
  %386 = vmatprep.subr.bf16.mxu0 0
  %387 = vmatpush1.bf16.msra.mxu0 0
  %388 = vmatprep.subr.bf16.mxu0 0
  %389 = vmatpush1.bf16.msra.mxu0 0
  %390 = vmatprep.subr.bf16.mxu0 0
  %391 = vmatpush1.bf16.msra.mxu0 0
  %392 = vmatprep.subr.bf16.mxu0 0
  %393 = vmatpush1.bf16.msra.mxu0 0
  %394 = vmatprep.mubr.bf16.mxu0 0
  %395 = vmatmul.mubr.bf16.gmra.mrb[0].mxu0 %v357
  %v396 = vpop.f32.mrb[0].mxu0
  %v397 = vadd.f32 %v342, %v396
  %v398 = vpop.f32.mrb[0].mxu0
  %v399 = vpop.f32.mrb[0].mxu0
  %v400 = vadd.f32 %v342, %v399
  %v401 = vpop.f32.mrb[0].mxu0
  %402 = vmatprep.mubr.bf16.mxu0 0
  %403 = vmatmul.mubr.bf16.gmra.mrb[0].mxu0 %v360
  %v404 = vpop.f32.mrb[0].mxu0
  %v405 = vadd.f32 %v342, %v404
  %v406 = vpop.f32.mrb[0].mxu0
  %v407 = vpop.f32.mrb[0].mxu0
  %v408 = vadd.f32 %v342, %v407
  %v409 = vpop.f32.mrb[0].mxu0
  %410 = vdwg.mxu0
  %vm411 = vcmask 64512
  %412 = vst.msk [vmem:[%s7] sm:$0xff] %vm411, %v397
  %413 = vst.msk [vmem:[%s7 + $0x8] sm:$0xff] %vm411, %v400
  %414 = vst.msk [vmem:[%s7 + $0x10] sm:$0xff] %vm411, %v405
  %vm415 = vcmask 60416
  %416 = vst.msk [vmem:[%s7 + $0x18] sm:$0xf] %vm415, %v408
  // Predicated region
  $region30: #{tpu_custom_call.1} parent=0 // pred_check
    _
  $region31: #{tpu_custom_call.1} parent=0 // pred_check_branch
    %418 = sbr.rel (0) target = $region33
  $region32: #{tpu_custom_call.1} parent=0 // pred_region
    _
  $region33: #{tpu_custom_call.1} parent=0 // pred_fallthru
    _
  // Predicated region
  $region34: #{tpu_custom_call.1} parent=0 // pred_check
    _
  $region35: #{tpu_custom_call.1} parent=0 // pred_check_branch
    %420 = sbr.rel (0) target = $region37
  $region36: #{tpu_custom_call.1} parent=0 // pred_region
    _
  $region37: #{tpu_custom_call.1} parent=0 // pred_fallthru
    _

</llo_original>
